<compile_context>
chip_gen: v7x
topology: tpu7x:2x2x1
jax: 0.10.0
libtpu: 0.0.40
codegen_flags: <defaults>
</compile_context>

<pallas_src>
import jax
import jax.numpy as jnp
from jax.experimental import pallas as pl
from jax.experimental.pallas import tpu as pltpu

NEG_SLOPE = 0.1


def _inconv_kernel(x_ref, w_ref, b_ref, o_ref):
    # x_ref: (H+2, (TW+2)*Cin)        padded column strip, lane-dense (W,C fused),
    #                                 VMEM-resident across the row-tile grid axis.
    # w_ref: (3, (TW+2)*Cin, TW*Cout) banded weight slab (one band per ky).
    # b_ref: (1, TW*Cout)             bias replicated over the TW output columns.
    # o_ref: (TH, TW*Cout)            lane-dense output tile.
    th = o_ref.shape[0]
    r = pl.program_id(2)
    row0 = r * th
    if th % 8 == 0:
        row0 = pl.multiple_of(row0, 8)        # aligned sublane slice hint

    # Start from the (broadcast) bias; accumulate the 3 ky bands in f32.
    acc = b_ref[...].astype(jnp.float32)
    for ky in range(3):                       # static unroll -> 3 MXU matmuls
        a = x_ref[pl.ds(row0 + ky, th), :]    # (TH, (TW+2)*Cin)
        acc = acc + jnp.dot(a, w_ref[ky],
                            preferred_element_type=jnp.float32)

    acc = jnp.where(acc >= 0, acc, NEG_SLOPE * acc)   # LeakyReLU(0.1) on VPU
    o_ref[...] = acc.astype(o_ref.dtype)              # cast only at the store


def _pick_tiles(h, w, cout, tile_h, tile_w):
    if tile_w is None:
        tile_w = w
        for cand in range(w, 0, -1):
            if w % cand == 0 and cand * cout <= 2048:   # bound lanes / slab size
                tile_w = cand
                break
    if tile_h is None:
        tile_h = h
        for cand in (256, 128, 64, 32, 16, 8):          # fits all VMEM generations
            if h % cand == 0:
                tile_h = cand
                break
    return tile_h, tile_w


def _banded_weight_slab(w_oihw, tile_w, dtype):
    """(Cout, Cin, 3, 3) -> (3, (TW+2)*Cin, TW*Cout) Toeplitz slab.

    slab[ky, u*Cin+ci, w*Cout+co] = W[co, ci, ky, u-w] for 0 <= u-w <= 2, else 0.
    Folding kx (and Cin) into the contraction dim lets the kernel run plain
    matmuls on activations in their natural lane-dense layout (no im2col
    relayouts) while producing a lane-dense (TH, TW*Cout) output directly.
    """
    cout, cin, _, _ = w_oihw.shape
    w_hwio = jnp.transpose(w_oihw, (2, 3, 1, 0)).astype(jnp.float32)  # (3,3,Cin,Cout)
    u = jnp.arange(tile_w + 2)
    wv = jnp.arange(tile_w)
    kx = jnp.arange(3)
    sel = (u[None, :, None] == wv[None, None, :] + kx[:, None, None])
    sel = sel.astype(jnp.float32)                                     # (3, TW+2, TW)
    slab = jnp.einsum('xuw,yxio->yuiwo', sel, w_hwio)                 # (3,TW+2,Cin,TW,Cout)
    return slab.reshape(3, (tile_w + 2) * cin, tile_w * cout).astype(dtype)


def inconv_pallas(x_nchw, w_oihw, bias, *, tile_h=None, tile_w=None):
    """InConv forward: Conv2d(k=3, pad=1) + LeakyReLU(0.1).

    x_nchw: (N, Cin, H, W); w_oihw: (Cout, Cin, 3, 3); bias: (Cout,)
    returns (N, Cout, H, W)
    """
    n, cin, h, w = x_nchw.shape
    cout = w_oihw.shape[0]
    th, tw = _pick_tiles(h, w, cout, tile_h, tile_w)
    assert h % th == 0 and w % tw == 0, (h, w, th, tw)
    if th != h:
        assert th % 8 == 0, "row tile must be a multiple of 8 unless it spans H"
    if tw != w:
        assert (tw * cout) % 128 == 0, "TW*Cout must be a multiple of 128 unless TW == W"
    nrows, ncols = h // th, w // tw
    span = (tw + 2) * cin
    twc = tw * cout
    dtype = x_nchw.dtype

    # Boundary glue (layout only): NCHW -> NHWC, zero pad (padding=1), collapse
    # (W, Cin) into one lane-dense axis, split wide images into column strips
    # with a 2-column halo (a pure reshape when ncols == 1, as in the demo).
    x_nhwc = jnp.transpose(x_nchw, (0, 2, 3, 1))
    x_pad = jnp.pad(x_nhwc, ((0, 0), (1, 1), (1, 1), (0, 0)))
    x_flat = x_pad.reshape(n, h + 2, (w + 2) * cin)
    if ncols == 1:
        x_strips = x_flat[:, None]                          # (N, 1, H+2, span)
    else:
        x_strips = jnp.stack(
            [x_flat[:, :, c * tw * cin:(c * tw + tw + 2) * cin]
             for c in range(ncols)], axis=1)                # (N, ncols, H+2, span)

    w_slab = _banded_weight_slab(w_oihw, tw, dtype)         # (3, span, twc)
    b_slab = jnp.tile(bias.astype(jnp.float32), tw).reshape(1, twc)

    # VMEM budget: double-buffered input strip + weight slab + output tile,
    # plus f32 accumulator headroom; clamp under v7x's 64 MiB physical VMEM.
    isz = jnp.dtype(dtype).itemsize
    est = (2 * ((h + 2) * span * isz
                + 3 * span * twc * w_slab.dtype.itemsize
                + th * twc * isz
                + twc * b_slab.dtype.itemsize)
           + th * twc * 4 + (2 << 20))
    vmem_limit = int(min(max(est, 16 << 20), 48 << 20))

    out_flat = pl.pallas_call(
        _inconv_kernel,
        out_shape=jax.ShapeDtypeStruct((n, h, w * cout), dtype),
        grid_spec=pltpu.PrefetchScalarGridSpec(
            num_scalar_prefetch=0,
            # Row tiles innermost: the input strip block stays VMEM-resident
            # across them (re-DMA only when (n, c) changes); weights/bias are
            # resident for the whole grid.
            grid=(n, ncols, nrows),
            in_specs=[
                pl.BlockSpec((None, None, h + 2, span),
                             lambda ni, ci, ri: (ni, ci, 0, 0)),
                pl.BlockSpec((3, span, twc), lambda ni, ci, ri: (0, 0, 0)),
                pl.BlockSpec((1, twc), lambda ni, ci, ri: (0, 0)),
            ],
            out_specs=pl.BlockSpec((None, th, twc),
                                   lambda ni, ci, ri: (ni, ri, ci)),
        ),
        compiler_params=pltpu.CompilerParams(
            dimension_semantics=("parallel", "parallel", "parallel"),
            vmem_limit_bytes=vmem_limit,
        ),
    )(x_strips, w_slab, b_slab)

    out_nhwc = out_flat.reshape(n, h, w, cout)
    return jnp.transpose(out_nhwc, (0, 3, 1, 2))            # back to NCHW


def _init_params(key, in_channels, out_channels):
    """Deterministic init matching nn.Conv2d + kaiming_uniform_(a=0.1)."""
    k_w, k_b = jax.random.split(key)
    fan_in = in_channels * 3 * 3
    gain_sq = 2.0 / (1.0 + NEG_SLOPE ** 2)
    w_bound = (3.0 * gain_sq / fan_in) ** 0.5
    w = jax.random.uniform(
        k_w, (out_channels, in_channels, 3, 3),
        minval=-w_bound, maxval=w_bound, dtype=jnp.float32)
    b_bound = 1.0 / (fan_in ** 0.5)
    b = jax.random.uniform(
        k_b, (out_channels,), minval=-b_bound, maxval=b_bound, dtype=jnp.float32)
    return w, b


if __name__ == "__main__":
    key = jax.random.PRNGKey(0)
    k_x, k_p = jax.random.split(key)

    N, Cin, H, W = 2, 4, 16, 16
    Cout = 8

    x = jax.random.normal(k_x, (N, Cin, H, W), dtype=jnp.float32)
    w, b = _init_params(k_p, Cin, Cout)

    # tile_h=8 -> 2 row tiles per image: exercises the spatial-tiling grid and
    # gives >= 4 independent parallel grid steps (both v7x TCs busy).
    out = inconv_pallas(x, w, b, tile_h=8)
    out = jax.block_until_ready(out)

    # Reference: plain JAX conv (NCHW / OIHW) + bias + LeakyReLU.
    ref = jax.lax.conv_general_dilated(
        x, w, window_strides=(1, 1), padding=((1, 1), (1, 1)),
        dimension_numbers=("NCHW", "OIHW", "NCHW"))
    ref = ref + b.reshape(1, Cout, 1, 1)
    ref = jnp.where(ref >= 0, ref, NEG_SLOPE * ref)

    assert out.shape == (N, Cout, H, W)
    assert jnp.allclose(out, ref, atol=1e-4, rtol=1e-4), float(
        jnp.max(jnp.abs(out - ref)))

    print("KERNEL_OK")
</pallas_src>

<mosaic_0001>
module attributes {stable_mosaic.version = 11 : i64} {
  func.func @_inconv_kernel(%arg0: i32, %arg1: i32, %arg2: i32, %arg3: memref<1x1x18x72xf32, #tpu.memory_space<vmem>>, %arg4: memref<3x72x128xf32, #tpu.memory_space<vmem>>, %arg5: memref<1x128xf32, #tpu.memory_space<vmem>>, %arg6: memref<1x8x128xf32, #tpu.memory_space<vmem>>) attributes {dimension_semantics = [#tpu.dimension_semantics<parallel>, #tpu.dimension_semantics<parallel>, #tpu.dimension_semantics<parallel>], iteration_bounds = array<i64: 2, 1, 2>, scalar_prefetch = 0 : i64, scratch_operands = 0 : i64, tpu.core_type = #tpu.core_type<tc>, window_params = [{transform_indices = @transform_0, window_bounds = array<i64: 1, 1, 18, 72>}, {pipeline_mode = #tpu.pipeline_mode<synchronous>, transform_indices = @transform_1, window_bounds = array<i64: 3, 72, 128>}, {pipeline_mode = #tpu.pipeline_mode<synchronous>, transform_indices = @transform_2, window_bounds = array<i64: 1, 128>}, {transform_indices = @transform_3, window_bounds = array<i64: 1, 8, 128>}]} {
    %c8_i32 = arith.constant 8 : i32
    %0 = arith.muli %arg2, %c8_i32 : i32
    %1 = tpu.assume_multiple %0, 8 : i32
    %c0 = arith.constant 0 : index
    %c0_0 = arith.constant 0 : index
    %2 = vector.load %arg5[%c0, %c0_0] : memref<1x128xf32, #tpu.memory_space<vmem>>, vector<1x128xf32>
    %c0_i32 = arith.constant 0 : i32
    %3 = arith.addi %1, %c0_i32 : i32
    %c0_1 = arith.constant 0 : index
    %c0_2 = arith.constant 0 : index
    %4 = arith.index_cast %3 : i32 to index
    %c0_3 = arith.constant 0 : index
    %5 = vector.load %arg3[%c0_1, %c0_2, %4, %c0_3] : memref<1x1x18x72xf32, #tpu.memory_space<vmem>>, vector<1x1x8x72xf32>
    %6 = vector.shape_cast %5 : vector<1x1x8x72xf32> to vector<8x72xf32>
    %c0_4 = arith.constant 0 : index
    %c0_5 = arith.constant 0 : index
    %c0_6 = arith.constant 0 : index
    %7 = vector.load %arg4[%c0_4, %c0_5, %c0_6] : memref<3x72x128xf32, #tpu.memory_space<vmem>>, vector<1x72x128xf32>
    %8 = vector.shape_cast %7 : vector<1x72x128xf32> to vector<72x128xf32>
    %cst = arith.constant dense<0.000000e+00> : vector<8x128xf32>
    %9 = tpu.matmul %6, %8, %cst {dimension_numbers = #tpu.dot_dimension_numbers<[1], [0], [0], [1], [0, 0, 1, 1], [], []>} : vector<8x72xf32>, vector<72x128xf32>, vector<8x128xf32> -> vector<8x128xf32>
    %10 = vector.broadcast %2 : vector<1x128xf32> to vector<8x128xf32>
    %11 = arith.addf %10, %9 : vector<8x128xf32>
    %c1_i32 = arith.constant 1 : i32
    %12 = arith.addi %1, %c1_i32 : i32
    %c0_7 = arith.constant 0 : index
    %c0_8 = arith.constant 0 : index
    %13 = arith.index_cast %12 : i32 to index
    %c0_9 = arith.constant 0 : index
    %14 = vector.load %arg3[%c0_7, %c0_8, %13, %c0_9] : memref<1x1x18x72xf32, #tpu.memory_space<vmem>>, vector<1x1x8x72xf32>
    %15 = vector.shape_cast %14 : vector<1x1x8x72xf32> to vector<8x72xf32>
    %c1 = arith.constant 1 : index
    %c0_10 = arith.constant 0 : index
    %c0_11 = arith.constant 0 : index
    %16 = vector.load %arg4[%c1, %c0_10, %c0_11] : memref<3x72x128xf32, #tpu.memory_space<vmem>>, vector<1x72x128xf32>
    %17 = vector.shape_cast %16 : vector<1x72x128xf32> to vector<72x128xf32>
    %cst_12 = arith.constant dense<0.000000e+00> : vector<8x128xf32>
    %18 = tpu.matmul %15, %17, %cst_12 {dimension_numbers = #tpu.dot_dimension_numbers<[1], [0], [0], [1], [0, 0, 1, 1], [], []>} : vector<8x72xf32>, vector<72x128xf32>, vector<8x128xf32> -> vector<8x128xf32>
    %19 = arith.addf %11, %18 : vector<8x128xf32>
    %c2_i32 = arith.constant 2 : i32
    %20 = arith.addi %1, %c2_i32 : i32
    %c0_13 = arith.constant 0 : index
    %c0_14 = arith.constant 0 : index
    %21 = arith.index_cast %20 : i32 to index
    %c0_15 = arith.constant 0 : index
    %22 = vector.load %arg3[%c0_13, %c0_14, %21, %c0_15] : memref<1x1x18x72xf32, #tpu.memory_space<vmem>>, vector<1x1x8x72xf32>
    %23 = vector.shape_cast %22 : vector<1x1x8x72xf32> to vector<8x72xf32>
    %c2 = arith.constant 2 : index
    %c0_16 = arith.constant 0 : index
    %c0_17 = arith.constant 0 : index
    %24 = vector.load %arg4[%c2, %c0_16, %c0_17] : memref<3x72x128xf32, #tpu.memory_space<vmem>>, vector<1x72x128xf32>
    %25 = vector.shape_cast %24 : vector<1x72x128xf32> to vector<72x128xf32>
    %cst_18 = arith.constant dense<0.000000e+00> : vector<8x128xf32>
    %26 = tpu.matmul %23, %25, %cst_18 {dimension_numbers = #tpu.dot_dimension_numbers<[1], [0], [0], [1], [0, 0, 1, 1], [], []>} : vector<8x72xf32>, vector<72x128xf32>, vector<8x128xf32> -> vector<8x128xf32>
    %27 = arith.addf %19, %26 : vector<8x128xf32>
    %cst_19 = arith.constant 0.000000e+00 : f32
    %28 = vector.broadcast %cst_19 : f32 to vector<8x128xf32>
    %29 = arith.cmpf oge, %27, %28 : vector<8x128xf32>
    %cst_20 = arith.constant 1.000000e-01 : f32
    %30 = vector.broadcast %cst_20 : f32 to vector<8x128xf32>
    %31 = arith.mulf %30, %27 : vector<8x128xf32>
    %32 = arith.select %29, %27, %31 : vector<8x128xi1>, vector<8x128xf32>
    %c0_21 = arith.constant 0 : index
    %c0_22 = arith.constant 0 : index
    %c0_23 = arith.constant 0 : index
    %33 = vector.load %arg6[%c0_21, %c0_22, %c0_23] : memref<1x8x128xf32, #tpu.memory_space<vmem>>, vector<1x8x128xf32>
    %34 = vector.shape_cast %33 : vector<1x8x128xf32> to vector<8x128xf32>
    %35 = vector.shape_cast %32 : vector<8x128xf32> to vector<1x8x128xf32>
    tpu.vector_store %arg6[%c0_21, %c0_22, %c0_23], %35 {strides = array<i32>} : memref<1x8x128xf32, #tpu.memory_space<vmem>>, vector<1x8x128xf32>,
    return
  }
  func.func @transform_0(%arg0: i32, %arg1: i32, %arg2: i32) -> (i32, i32, i32, i32) {
    %c0_i32 = arith.constant 0 : i32
    %c0_i32_0 = arith.constant 0 : i32
    %c0_i32_1 = arith.constant 0 : i32
    return %arg0, %arg1, %c0_i32, %c0_i32_0 : i32, i32, i32, i32
  }
  func.func @transform_1(%arg0: i32, %arg1: i32, %arg2: i32) -> (i32, i32, i32) {
    %c0_i32 = arith.constant 0 : i32
    %c0_i32_0 = arith.constant 0 : i32
    %c0_i32_1 = arith.constant 0 : i32
    %c0_i32_2 = arith.constant 0 : i32
    return %c0_i32, %c0_i32_0, %c0_i32_1 : i32, i32, i32
  }
  func.func @transform_2(%arg0: i32, %arg1: i32, %arg2: i32) -> (i32, i32) {
    %c0_i32 = arith.constant 0 : i32
    %c0_i32_0 = arith.constant 0 : i32
    %c0_i32_1 = arith.constant 0 : i32
    return %c0_i32, %c0_i32_0 : i32, i32
  }
  func.func @transform_3(%arg0: i32, %arg1: i32, %arg2: i32) -> (i32, i32, i32) {
    %c0_i32 = arith.constant 0 : i32
    return %arg0, %arg2, %arg1 : i32, i32, i32
  }
}

</mosaic_0001>

<llo_original>
// kernel: tpu_custom_call.1
$region0: #{tpu_custom_call.1}
  #allocation0 [shape = 'u32[]', space=smem, size = 0x4, offset = 0x4, fixed_abs, tag = 'smem constant byte address 0x4 - core index']
  #allocation1 [shape = 'u32[144,128]{1,0:T(1,128)}', space=vmem, size = 0x12000, scoped, tag = 'internal scratch']
  %s0 = inlined_call_operand.vmem [shape: f32[2,1,18,72], index: 0, kind: input, shape index: {}]
  %s1 = inlined_call_operand.hbm [shape: f32[3,72,128], index: 1, kind: input, shape index: {}]
  %s2 = inlined_call_operand.vmem [shape: f32[1,128], index: 2, kind: input, shape index: {}]
  %s3 = inlined_call_operand.hbm [shape: f32[2,16,128], index: 3, kind: output, shape index: {}]
  %s4 = sld [smem:[#allocation0]]
  $region49: #{tpu_custom_call.1} parent=0
    _
  %s6 = ssub.s32 1, %s4
  %s7 = scalar_select 0, %s6, %s4
  $region1: #{tpu_custom_call.1} parent=0
    #allocation2 [shape = 'u8[110592]{0}', space=vmem, size = 0x1b000, scoped, tag = 'input window, operand 1, single buffered']
    #allocation3 [shape = 's32[2]{0}', space=sflag, size = 0x8, scoped, tag = 'scoped memory for tpu_custom_call.1']
    #allocation4 [shape = 's32[2]{0}', space=sflag, size = 0x8, scoped, tag = 'scoped memory for tpu_custom_call.1']
    #allocation5 [shape = 'u8[8192]{0}', space=vmem, size = 0x2000, scoped, tag = 'output window, operand 0']
    %8 = vsyncpa [#allocation3], 0
    %9 = vsyncpa [#allocation4], 0
    %s10 = scalar_lea.sflag [#allocation4], 1
    %11 = vsyncpa %s10, 0
    loop: start=0, step=1, limit=6
    $region2: #{tpu_custom_call.1} parent=1 // loop_pre_header
      _
    $region3: #{tpu_custom_call.1} parent=1 // loop_header
      %s13 = sphi 0, %s17
      %p14 = scmp.ge.s32.totalorder %s13, 6
      %s20 = sphi 0, %s39
      %s21 = sphi 0, %s35
      %s22 = sphi 0, %s31
      %s23 = sphi 0, %s20
      %s24 = sphi 0, %s21
      %s25 = sphi 0, %s22
      %s26 = sphi 0, %s23
      %s27 = sphi 0, %s24
      %s28 = sphi 0, %s25
      %s44 = sphi 0, %s46
      %s47 = sphi 0, %s44
      %s48 = sphi 0, %s47
      %s64 = sphi 0, %s48
      %s68 = sphi 0, %s68
      %s70 = sphi 0, %s68
      %s71 = sphi 0, %s70
      %s85 = sphi 0, %s71
      %s89 = sphi 0, %s89
      %s91 = sphi 0, %s89
      %s92 = sphi 0, %s91
      %s106 = sphi 0, %s92
      %s116 = sphi 0, %s118
      %s119 = sphi 0, %s116
      %s120 = sphi 0, %s119
      %s136 = sphi 0, %s120
    $region4: #{tpu_custom_call.1} parent=1 // loop_header_branch
      %16 = sbr.rel (%p14) target = $region8
    $region5: #{tpu_custom_call.1} parent=1 // loop_body
      %s18 = ssub.s32 %s13, 1
      %s19 = ssub.s32 %s13, 2
      %s29 = sadd.s32 1, %s22
      %p30 = scmp.ge.s32.totalorder %s29, 2
      %s31 = scalar_select %p30, 0, %s29
      %s32 = sadd.s32 1, %s21
      %s33 = scalar_select %p30, %s32, %s21
      %p34 = scmp.ge.s32.totalorder %s33, 1
      %s35 = scalar_select %p34, 0, %s33
      %s36 = sadd.s32 1, %s20
      %s37 = scalar_select %p34, %s36, %s20
      %p38 = scmp.ge.s32.totalorder %s37, 2
      %s39 = scalar_select %p38, 0, %s37
      %s40 = ssub.s32 %s20, %s39
      %s41 = ssub.s32 %s21, %s35
      %s42 = sor.u32 %s40, %s41
      %p43 = scmp.eq.s32.totalorder %s42, 0
      %s45 = sadd.s32 %s44, 1
      %s46 = scalar_select %p43, %s44, %s45
      %p49 = pneg %p43
      %p50 = scmp.eq.s32.totalorder %s13, 3
      %p51 = por %p49, %p50
      %p52 = scmp.ne.s32.totalorder %s44, %s47
      %p53 = scmp.eq.s32.totalorder %s13, 0
      %p54 = por %p52, %p53
      %p55 = scmp.ne.s32.totalorder %s44, %s47
      %p56 = scmp.eq.s32.totalorder %s18, 3
      %p57 = por %p55, %p56
      %p58 = scmp.ne.s32.totalorder %s47, %s48
      %p59 = scmp.eq.s32.totalorder %s18, 0
      %p60 = por %p58, %p59
      %p61 = scmp.ne.s32.totalorder %s47, %s48
      %p62 = scmp.eq.s32.totalorder %s19, 3
      %p63 = por %p61, %p62
      %p65 = scmp.ne.s32.totalorder %s48, %s64
      %p66 = scmp.eq.s32.totalorder %s19, 0
      %p67 = por %p65, %p66
      %s69 = sadd.s32 %s68, 1
      %p72 = scmp.eq.s32.totalorder %s13, 3
      %p73 = scmp.ne.s32.totalorder %s68, %s70
      %p74 = scmp.eq.s32.totalorder %s13, 0
      %p75 = por %p73, %p74
      %p76 = scmp.ne.s32.totalorder %s68, %s70
      %p77 = scmp.eq.s32.totalorder %s18, 3
      %p78 = por %p76, %p77
      %p79 = scmp.ne.s32.totalorder %s70, %s71
      %p80 = scmp.eq.s32.totalorder %s18, 0
      %p81 = por %p79, %p80
      %p82 = scmp.ne.s32.totalorder %s70, %s71
      %p83 = scmp.eq.s32.totalorder %s19, 3
      %p84 = por %p82, %p83
      %p86 = scmp.ne.s32.totalorder %s71, %s85
      %p87 = scmp.eq.s32.totalorder %s19, 0
      %p88 = por %p86, %p87
      %s90 = sadd.s32 %s89, 1
      %p93 = scmp.eq.s32.totalorder %s13, 3
      %p94 = scmp.ne.s32.totalorder %s89, %s91
      %p95 = scmp.eq.s32.totalorder %s13, 0
      %p96 = por %p94, %p95
      %p97 = scmp.ne.s32.totalorder %s89, %s91
      %p98 = scmp.eq.s32.totalorder %s18, 3
      %p99 = por %p97, %p98
      %p100 = scmp.ne.s32.totalorder %s91, %s92
      %p101 = scmp.eq.s32.totalorder %s18, 0
      %p102 = por %p100, %p101
      %p103 = scmp.ne.s32.totalorder %s91, %s92
      %p104 = scmp.eq.s32.totalorder %s19, 3
      %p105 = por %p103, %p104
      %p107 = scmp.ne.s32.totalorder %s92, %s106
      %p108 = scmp.eq.s32.totalorder %s19, 0
      %p109 = por %p107, %p108
      %s110 = ssub.s32 %s20, %s39
      %s111 = ssub.s32 %s22, %s31
      %s112 = sor.u32 %s110, %s111
      %s113 = ssub.s32 %s21, %s35
      %s114 = sor.u32 %s112, %s113
      %p115 = scmp.eq.s32.totalorder %s114, 0
      %s117 = sadd.s32 %s116, 1
      %s118 = scalar_select %p115, %s116, %s117
      %p121 = pneg %p115
      %p122 = scmp.eq.s32.totalorder %s13, 3
      %p123 = por %p121, %p122
      %p124 = scmp.ne.s32.totalorder %s116, %s119
      %p125 = scmp.eq.s32.totalorder %s13, 0
      %p126 = por %p124, %p125
      %p127 = scmp.ne.s32.totalorder %s116, %s119
      %p128 = scmp.eq.s32.totalorder %s18, 3
      %p129 = por %p127, %p128
      %p130 = scmp.ne.s32.totalorder %s119, %s120
      %p131 = scmp.eq.s32.totalorder %s18, 0
      %p132 = por %p130, %p131
      %p133 = scmp.ne.s32.totalorder %s119, %s120
      %p134 = scmp.eq.s32.totalorder %s19, 3
      %p135 = por %p133, %p134
      %p137 = scmp.ne.s32.totalorder %s120, %s136
      %p138 = scmp.eq.s32.totalorder %s19, 0
      %p139 = por %p137, %p138
      %p140 = scmp.le.s32.totalorder 1, %s13
      %p141 = scmp.lt.s32.totalorder %s13, 5
      %p142 = pnand %p140, %p141
      %p143 = pneg %p142
      // Predicated region
      $region9: #{tpu_custom_call.1} parent=5 // pred_check
        _
      $region10: #{tpu_custom_call.1} parent=5 // pred_check_branch
        %145 = sbr.rel (%p142) target = $region12
      $region11: #{tpu_custom_call.1} parent=5 // pred_region
        %s146 = ssub.s32 %s13, 1
        // Predicated region
        $region13: #{tpu_custom_call.1} parent=11 // pred_check
          %p147 = pneg %p81
        $region14: #{tpu_custom_call.1} parent=11 // pred_check_branch
          %149 = sbr.rel (%p147) target = $region16
        $region15: #{tpu_custom_call.1} parent=11 // pred_region
          %s151 = ssub.s32 3456, 3456
          %152 = vsyncadd [#allocation3], %s151
          %s153 = sshll.u32 [#allocation2], 4
          %s154 = int_to_ptr.vmem [resolvable:$true] %s153
          %159 = dma.hbm_to_vmem [thread:$0]  %s1, 3456, %s154, [#allocation3], 128, 128, 8
        $region16: #{tpu_custom_call.1} parent=11 // pred_fallthru
          _
        // Predicated region
        $region17: #{tpu_custom_call.1} parent=11 // pred_check
          %p160 = pneg %p102
        $region18: #{tpu_custom_call.1} parent=11 // pred_check_branch
          %162 = sbr.rel (%p160) target = $region20
        $region19: #{tpu_custom_call.1} parent=11 // pred_region
          _
        $region20: #{tpu_custom_call.1} parent=11 // pred_fallthru
          _
      $region12: #{tpu_custom_call.1} parent=5 // pred_fallthru
        _
      %p163 = scmp.lt.s32.totalorder %s13, 4
      // Predicated region
      $region21: #{tpu_custom_call.1} parent=5 // pred_check
        %p164 = pneg %p163
      $region22: #{tpu_custom_call.1} parent=5 // pred_check_branch
        %166 = sbr.rel (%p164) target = $region24
      $region23: #{tpu_custom_call.1} parent=5 // pred_region
        // Predicated region
        $region25: #{tpu_custom_call.1} parent=23 // pred_check
          %p167 = pneg %p54
        $region26: #{tpu_custom_call.1} parent=23 // pred_check_branch
          %169 = sbr.rel (%p167) target = $region28
        $region27: #{tpu_custom_call.1} parent=23 // pred_region
          %p170 = scmp.lt.s32.totalorder %s20, 1
          %s171 = scalar_select %p170, %s20, 1
          %p172 = scmp.lt.s32.totalorder %s21, 0
          %s173 = scalar_select %p172, %s21, 0
          %s174 = smul.addr %s173, 3
          %s175 = smul.addr %s171, 3
          %s176 = sadd.s32 %s174, %s175
          %s177 = smul.addr %s176, 8
          %s178 = scalar_lea.vmem %s0, %s177
        $region28: #{tpu_custom_call.1} parent=23 // pred_fallthru
          _
      $region24: #{tpu_custom_call.1} parent=5 // pred_fallthru
        _
      %p179 = scmp.le.s32.totalorder 1, %s13
      %p180 = scmp.lt.s32.totalorder %s13, 5
      %p181 = pnand %p179, %p180
      %p182 = pneg %p181
      // Predicated region
      $region29: #{tpu_custom_call.1} parent=5 // pred_check
        _
      $region30: #{tpu_custom_call.1} parent=5 // pred_check_branch
        %184 = sbr.rel (%p181) target = $region32
      $region31: #{tpu_custom_call.1} parent=5 // pred_region
        %s185 = ssub.s32 %s13, 1
        // Predicated region
        $region33: #{tpu_custom_call.1} parent=31 // pred_check
          %p186 = pneg %p81
        $region34: #{tpu_custom_call.1} parent=31 // pred_check_branch
          %188 = sbr.rel (%p186) target = $region36
        $region35: #{tpu_custom_call.1} parent=31 // pred_region
          %189 = dma.done [#allocation3], 3456
        $region36: #{tpu_custom_call.1} parent=31 // pred_fallthru
          _
        %p190 = scmp.lt.s32.totalorder %s23, 1
        %s191 = scalar_select %p190, %s23, 1
        %p192 = scmp.lt.s32.totalorder %s24, 0
        %s193 = scalar_select %p192, %s24, 0
        %s194 = smul.addr %s193, 3
        %s195 = smul.addr %s191, 3
        %s196 = sadd.s32 %s194, %s195
        %s197 = smul.addr %s196, 8
        %s198 = scalar_lea.vmem %s0, %s197
        %p199 = pneg %p60
        %p200 = pneg %p57
        %p201 = pneg %p81
        %p202 = pneg %p78
        %p203 = pneg %p102
        %p204 = pneg %p99
        %p205 = pneg %p132
        %p206 = pneg %p129
        %s207 = sand.u32 %s119, 1
        %s208 = scalar_lea.sflag [#allocation4], %s207
        %s209 = sand.u32 %s119, 1
        %s210 = smul.addr %s209, 8
        %s211 = scalar_lea.vmem [#allocation5], %s210
        %p212 = scmp.lt.s32.totalorder %s23, 1
        %s213 = scalar_select %p212, %s23, 1
        %p214 = scmp.lt.s32.totalorder %s24, 0
        %s215 = scalar_select %p214, %s24, 0
        %s216 = smul.addr %s215, 3
        %s217 = smul.addr %s213, 3
        %s218 = sadd.s32 %s216, %s217
        %s219 = smul.addr %s218, 8
        %s220 = scalar_lea.vmem %s0, %s219
        %s221 = smul.u32 %s25, 8
        %v222 = vld [vmem:[%s2] sm:$0x1]
        %s223 = scalar_lea.vmem %s220, %s221
        %v224 = vld [vmem:[%s223] sm:$0xff]
        %v225 = vld [vmem:[#allocation2] sm:$0xff]
        %v226 = vld [vmem:[#allocation2 + $0x8] sm:$0xff]
        %v227 = vld [vmem:[#allocation2 + $0x10] sm:$0xff]
        %v228 = vld [vmem:[#allocation2 + $0x18] sm:$0xff]
        %v229 = vld [vmem:[#allocation2 + $0x20] sm:$0xff]
        %v230 = vld [vmem:[#allocation2 + $0x28] sm:$0xff]
        %v231 = vld [vmem:[#allocation2 + $0x30] sm:$0xff]
        %v232 = vld [vmem:[#allocation2 + $0x38] sm:$0xff]
        %v233 = vld [vmem:[#allocation2 + $0x40] sm:$0xff]
        %vm234 = vcmask 588800
        %v236 = vsel %vm234, %v224, 0
        %238 = vmatprep.subr.mxu0 0.0
        %239 = vmatpush1.msra.mxu0 %v225
        %240 = vmatprep.subr.mxu0 0.0
        %241 = vmatpush1.msra.mxu0 %v226
        %242 = vmatprep.subr.mxu0 0.0
        %243 = vmatpush1.msra.mxu0 %v227
        %244 = vmatprep.subr.mxu0 0.0
        %245 = vmatpush1.msra.mxu0 %v228
        %246 = vmatprep.subr.mxu0 0.0
        %247 = vmatpush1.msra.mxu0 %v229
        %248 = vmatprep.subr.mxu0 0.0
        %249 = vmatpush1.msra.mxu0 %v230
        %250 = vmatprep.subr.mxu0 0.0
        %251 = vmatpush1.msra.mxu0 %v231
        %252 = vmatprep.subr.mxu0 0.0
        %253 = vmatpush1.msra.mxu0 %v232
        %254 = vmatprep.subr.mxu0 0.0
        %255 = vmatpush1.msra.mxu0 %v233
        %256 = vmatprep.subr.mxu0 0.0
        %257 = vmatpush1.msra.mxu0 0.0
        %258 = vmatprep.subr.mxu0 0.0
        %259 = vmatpush1.msra.mxu0 0.0
        %260 = vmatprep.subr.mxu0 0.0
        %261 = vmatpush1.msra.mxu0 0.0
        %262 = vmatprep.subr.mxu0 0.0
        %263 = vmatpush1.msra.mxu0 0.0
        %264 = vmatprep.subr.mxu0 0.0
        %265 = vmatpush1.msra.mxu0 0.0
        %266 = vmatprep.subr.mxu0 0.0
        %267 = vmatpush1.msra.mxu0 0.0
        %268 = vmatprep.subr.mxu0 0.0
        %269 = vmatpush1.msra.mxu0 0.0
        %270 = vmatprep.subr.mxu0 0.0
        %271 = vmatpush1.msra.mxu0 0.0
        %272 = vmatprep.subr.mxu0 0.0
        %273 = vmatpush1.msra.mxu0 0.0
        %274 = vmatprep.subr.mxu0 0.0
        %275 = vmatpush1.msra.mxu0 0.0
        %276 = vmatprep.subr.mxu0 0.0
        %277 = vmatpush1.msra.mxu0 0.0
        %278 = vmatprep.subr.mxu0 0.0
        %279 = vmatpush1.msra.mxu0 0.0
        %280 = vmatprep.subr.mxu0 0.0
        %281 = vmatpush1.msra.mxu0 0.0
        %282 = vmatprep.subr.mxu0 0.0
        %283 = vmatpush1.msra.mxu0 0.0
        %284 = vmatprep.subr.mxu0 0.0
        %285 = vmatpush1.msra.mxu0 0.0
        %286 = vmatprep.subr.mxu0 0.0
        %287 = vmatpush1.msra.mxu0 0.0
        %288 = vmatprep.subr.mxu0 0.0
        %289 = vmatpush1.msra.mxu0 0.0
        %290 = vmatprep.subr.mxu0 0.0
        %291 = vmatpush1.msra.mxu0 0.0
        %292 = vmatprep.subr.mxu0 0.0
        %293 = vmatpush1.msra.mxu0 0.0
        %294 = vmatprep.subr.mxu0 0.0
        %295 = vmatpush1.msra.mxu0 0.0
        %296 = vmatprep.subr.mxu0 0.0
        %297 = vmatpush1.msra.mxu0 0.0
        %298 = vmatprep.subr.mxu0 0.0
        %299 = vmatpush1.msra.mxu0 0.0
        %300 = vmatprep.subr.mxu0 0.0
        %301 = vmatpush1.msra.mxu0 0.0
        %302 = vmatprep.mubr.f32.mxu0 0.0
        %303 = vmatmul.mubr.f32.gmra.mrb[0].mxu0 %v236
        %v304 = vpop.f32.mrb[0].mxu0
        %v305 = vadd.f32 0.0, %v304
        %v306 = vpop.f32.mrb[0].mxu0
        %307 = vdwg.mxu0
        %v309 = vlaneseq
        %v310 = vshrl.u32 %v309, 7
        %v311 = vsub.s32 0, %v310
        %v312 = vrot.slane %v222, %v311
        %v314 = vadd.f32 %v312, %v305
        %s315 = sadd.s32 %s221, 1
        %s316 = scalar_lea.vmem %s220, %s315
        %v317 = vld [vmem:[%s316] sm:$0xff]
        %s318 = scalar_lea.vmem [#allocation2], 72
        %v319 = vld [vmem:[%s318] sm:$0xff]
        %v320 = vld [vmem:[%s318 + $0x8] sm:$0xff]
        %v321 = vld [vmem:[%s318 + $0x10] sm:$0xff]
        %v322 = vld [vmem:[%s318 + $0x18] sm:$0xff]
        %v323 = vld [vmem:[%s318 + $0x20] sm:$0xff]
        %v324 = vld [vmem:[%s318 + $0x28] sm:$0xff]
        %v325 = vld [vmem:[%s318 + $0x30] sm:$0xff]
        %v326 = vld [vmem:[%s318 + $0x38] sm:$0xff]
        %v327 = vld [vmem:[%s318 + $0x40] sm:$0xff]
        %v329 = vsel %vm234, %v317, 0
        %331 = vmatprep.subr.mxu0 0.0
        %332 = vmatpush1.msra.mxu0 %v319
        %333 = vmatprep.subr.mxu0 0.0
        %334 = vmatpush1.msra.mxu0 %v320
        %335 = vmatprep.subr.mxu0 0.0
        %336 = vmatpush1.msra.mxu0 %v321
        %337 = vmatprep.subr.mxu0 0.0
        %338 = vmatpush1.msra.mxu0 %v322
        %339 = vmatprep.subr.mxu0 0.0
        %340 = vmatpush1.msra.mxu0 %v323
        %341 = vmatprep.subr.mxu0 0.0
        %342 = vmatpush1.msra.mxu0 %v324
        %343 = vmatprep.subr.mxu0 0.0
        %344 = vmatpush1.msra.mxu0 %v325
        %345 = vmatprep.subr.mxu0 0.0
        %346 = vmatpush1.msra.mxu0 %v326
        %347 = vmatprep.subr.mxu0 0.0
        %348 = vmatpush1.msra.mxu0 %v327
        %349 = vmatprep.subr.mxu0 0.0
        %350 = vmatpush1.msra.mxu0 0.0
        %351 = vmatprep.subr.mxu0 0.0
        %352 = vmatpush1.msra.mxu0 0.0
        %353 = vmatprep.subr.mxu0 0.0
        %354 = vmatpush1.msra.mxu0 0.0
        %355 = vmatprep.subr.mxu0 0.0
        %356 = vmatpush1.msra.mxu0 0.0
        %357 = vmatprep.subr.mxu0 0.0
        %358 = vmatpush1.msra.mxu0 0.0
        %359 = vmatprep.subr.mxu0 0.0
        %360 = vmatpush1.msra.mxu0 0.0
        %361 = vmatprep.subr.mxu0 0.0
        %362 = vmatpush1.msra.mxu0 0.0
        %363 = vmatprep.subr.mxu0 0.0
        %364 = vmatpush1.msra.mxu0 0.0
        %365 = vmatprep.subr.mxu0 0.0
        %366 = vmatpush1.msra.mxu0 0.0
        %367 = vmatprep.subr.mxu0 0.0
        %368 = vmatpush1.msra.mxu0 0.0
        %369 = vmatprep.subr.mxu0 0.0
        %370 = vmatpush1.msra.mxu0 0.0
        %371 = vmatprep.subr.mxu0 0.0
        %372 = vmatpush1.msra.mxu0 0.0
        %373 = vmatprep.subr.mxu0 0.0
        %374 = vmatpush1.msra.mxu0 0.0
        %375 = vmatprep.subr.mxu0 0.0
        %376 = vmatpush1.msra.mxu0 0.0
        %377 = vmatprep.subr.mxu0 0.0
        %378 = vmatpush1.msra.mxu0 0.0
        %379 = vmatprep.subr.mxu0 0.0
        %380 = vmatpush1.msra.mxu0 0.0
        %381 = vmatprep.subr.mxu0 0.0
        %382 = vmatpush1.msra.mxu0 0.0
        %383 = vmatprep.subr.mxu0 0.0
        %384 = vmatpush1.msra.mxu0 0.0
        %385 = vmatprep.subr.mxu0 0.0
        %386 = vmatpush1.msra.mxu0 0.0
        %387 = vmatprep.subr.mxu0 0.0
        %388 = vmatpush1.msra.mxu0 0.0
        %389 = vmatprep.subr.mxu0 0.0
        %390 = vmatpush1.msra.mxu0 0.0
        %391 = vmatprep.subr.mxu0 0.0
        %392 = vmatpush1.msra.mxu0 0.0
        %393 = vmatprep.subr.mxu0 0.0
        %394 = vmatpush1.msra.mxu0 0.0
        %395 = vmatprep.mubr.f32.mxu0 0.0
        %396 = vmatmul.mubr.f32.gmra.mrb[0].mxu0 %v329
        %v397 = vpop.f32.mrb[0].mxu0
        %v398 = vadd.f32 0.0, %v397
        %v399 = vpop.f32.mrb[0].mxu0
        %400 = vdwg.mxu0
        %v401 = vadd.f32 %v314, %v398
        %s402 = sadd.s32 %s221, 2
        %s403 = scalar_lea.vmem %s220, %s402
        %v404 = vld [vmem:[%s403] sm:$0xff]
        %s405 = scalar_lea.vmem [#allocation2], 144
        %v406 = vld [vmem:[%s405] sm:$0xff]
        %v407 = vld [vmem:[%s405 + $0x8] sm:$0xff]
        %v408 = vld [vmem:[%s405 + $0x10] sm:$0xff]
        %v409 = vld [vmem:[%s405 + $0x18] sm:$0xff]
        %v410 = vld [vmem:[%s405 + $0x20] sm:$0xff]
        %v411 = vld [vmem:[%s405 + $0x28] sm:$0xff]
        %v412 = vld [vmem:[%s405 + $0x30] sm:$0xff]
        %v413 = vld [vmem:[%s405 + $0x38] sm:$0xff]
        %v414 = vld [vmem:[%s405 + $0x40] sm:$0xff]
        %v416 = vsel %vm234, %v404, 0
        %418 = vmatprep.subr.mxu0 0.0
        %419 = vmatpush1.msra.mxu0 %v406
        %420 = vmatprep.subr.mxu0 0.0
        %421 = vmatpush1.msra.mxu0 %v407
        %422 = vmatprep.subr.mxu0 0.0
        %423 = vmatpush1.msra.mxu0 %v408
        %424 = vmatprep.subr.mxu0 0.0
        %425 = vmatpush1.msra.mxu0 %v409
        %426 = vmatprep.subr.mxu0 0.0
        %427 = vmatpush1.msra.mxu0 %v410
        %428 = vmatprep.subr.mxu0 0.0
        %429 = vmatpush1.msra.mxu0 %v411
        %430 = vmatprep.subr.mxu0 0.0
        %431 = vmatpush1.msra.mxu0 %v412
        %432 = vmatprep.subr.mxu0 0.0
        %433 = vmatpush1.msra.mxu0 %v413
        %434 = vmatprep.subr.mxu0 0.0
        %435 = vmatpush1.msra.mxu0 %v414
        %436 = vmatprep.subr.mxu0 0.0
        %437 = vmatpush1.msra.mxu0 0.0
        %438 = vmatprep.subr.mxu0 0.0
        %439 = vmatpush1.msra.mxu0 0.0
        %440 = vmatprep.subr.mxu0 0.0
        %441 = vmatpush1.msra.mxu0 0.0
        %442 = vmatprep.subr.mxu0 0.0
        %443 = vmatpush1.msra.mxu0 0.0
        %444 = vmatprep.subr.mxu0 0.0
        %445 = vmatpush1.msra.mxu0 0.0
        %446 = vmatprep.subr.mxu0 0.0
        %447 = vmatpush1.msra.mxu0 0.0
        %448 = vmatprep.subr.mxu0 0.0
        %449 = vmatpush1.msra.mxu0 0.0
        %450 = vmatprep.subr.mxu0 0.0
        %451 = vmatpush1.msra.mxu0 0.0
        %452 = vmatprep.subr.mxu0 0.0
        %453 = vmatpush1.msra.mxu0 0.0
        %454 = vmatprep.subr.mxu0 0.0
        %455 = vmatpush1.msra.mxu0 0.0
        %456 = vmatprep.subr.mxu0 0.0
        %457 = vmatpush1.msra.mxu0 0.0
        %458 = vmatprep.subr.mxu0 0.0
        %459 = vmatpush1.msra.mxu0 0.0
        %460 = vmatprep.subr.mxu0 0.0
        %461 = vmatpush1.msra.mxu0 0.0
        %462 = vmatprep.subr.mxu0 0.0
        %463 = vmatpush1.msra.mxu0 0.0
        %464 = vmatprep.subr.mxu0 0.0
        %465 = vmatpush1.msra.mxu0 0.0
        %466 = vmatprep.subr.mxu0 0.0
        %467 = vmatpush1.msra.mxu0 0.0
        %468 = vmatprep.subr.mxu0 0.0
        %469 = vmatpush1.msra.mxu0 0.0
        %470 = vmatprep.subr.mxu0 0.0
        %471 = vmatpush1.msra.mxu0 0.0
        %472 = vmatprep.subr.mxu0 0.0
        %473 = vmatpush1.msra.mxu0 0.0
        %474 = vmatprep.subr.mxu0 0.0
        %475 = vmatpush1.msra.mxu0 0.0
        %476 = vmatprep.subr.mxu0 0.0
        %477 = vmatpush1.msra.mxu0 0.0
        %478 = vmatprep.subr.mxu0 0.0
        %479 = vmatpush1.msra.mxu0 0.0
        %480 = vmatprep.subr.mxu0 0.0
        %481 = vmatpush1.msra.mxu0 0.0
        %482 = vmatprep.mubr.f32.mxu0 0.0
        %483 = vmatmul.mubr.f32.gmra.mrb[0].mxu0 %v416
        %v484 = vpop.f32.mrb[0].mxu0
        %v485 = vadd.f32 0.0, %v484
        %v486 = vpop.f32.mrb[0].mxu0
        %487 = vdwg.mxu0
        %v488 = vadd.f32 %v401, %v485
        %vm489 = vcmp.ge.f32.partialorder %v488, 0.0
        %v490 = vmul.f32 %v488, 0.1
        %v491 = vsel %vm489, %v488, %v490
        %492 = vst [vmem:[%s211] sm:$0xff] %v491
        %s493 = sand.u32 %s119, 1
        %s494 = scalar_lea.sflag [#allocation4], %s493
        %s495 = sand.u32 %s119, 1
        %s496 = smul.addr %s495, 8
        %s497 = scalar_lea.vmem [#allocation5], %s496
        // Predicated region
        $region37: #{tpu_custom_call.1} parent=31 // pred_check
          %p498 = pneg %p129
        $region38: #{tpu_custom_call.1} parent=31 // pred_check_branch
          %500 = sbr.rel (%p498) target = $region40
        $region39: #{tpu_custom_call.1} parent=31 // pred_region
          %s502 = ssub.s32 128, 128
          %503 = vsyncadd %s494, %s502
          %s504 = sadd.s32 %s24, %s25
          %s505 = smul.addr %s23, 2
          %s506 = sadd.s32 %s504, %s505
          %s507 = smul.addr %s506, 128
          %s508 = scalar_lea.hbm %s3, %s507
          %s510 = sshll.u32 %s497, 4
          %s511 = int_to_ptr.vmem [resolvable:$true] %s510
          %513 = dma.vmem_to_hbm [thread:$0]  %s511, 128, %s508, %s494
        $region40: #{tpu_custom_call.1} parent=31 // pred_fallthru
          _
      $region32: #{tpu_custom_call.1} parent=5 // pred_fallthru
        _
      %p514 = scmp.le.s32.totalorder 2, %s13
      // Predicated region
      $region41: #{tpu_custom_call.1} parent=5 // pred_check
        %p515 = pneg %p514
      $region42: #{tpu_custom_call.1} parent=5 // pred_check_branch
        %517 = sbr.rel (%p515) target = $region44
      $region43: #{tpu_custom_call.1} parent=5 // pred_region
        %s518 = ssub.s32 %s13, 2
        // Predicated region
        $region45: #{tpu_custom_call.1} parent=43 // pred_check
          %p519 = pneg %p135
        $region46: #{tpu_custom_call.1} parent=43 // pred_check_branch
          %521 = sbr.rel (%p519) target = $region48
        $region47: #{tpu_custom_call.1} parent=43 // pred_region
          %s522 = sand.u32 %s120, 1
          %s523 = scalar_lea.sflag [#allocation4], %s522
          %s524 = sand.u32 %s120, 1
          %s525 = smul.addr %s524, 8
          %s526 = scalar_lea.vmem [#allocation5], %s525
          %527 = dma.done %s523, 128
        $region48: #{tpu_custom_call.1} parent=43 // pred_fallthru
          _
      $region44: #{tpu_custom_call.1} parent=5 // pred_fallthru
        _
    $region6: #{tpu_custom_call.1} parent=1 // loop_footer
      %s17 = sadd.s32 1, %s13
    $region7: #{tpu_custom_call.1} parent=1 // loop_footer_branch
      %12 = sbr.rel target = $region3
    $region8: #{tpu_custom_call.1} parent=1 // loop_exit
      _
    %528 = vsyncpa [#allocation3], 1
    %s529 = scalar_lea.sflag [#allocation3], 1
    %530 = vsyncpa %s529, 1
    %531 = vsyncpa [#allocation4], 1
    %s532 = scalar_lea.sflag [#allocation4], 1
    %533 = vsyncpa %s532, 1

</llo_original>
